<compile_context>
chip_gen: v5e
topology: v5e:2x2
jax: 0.10.0
libtpu: 0.0.40
codegen_flags: <defaults>
</compile_context>

<pallas_src>
import functools

import jax
import jax.numpy as jnp
from jax import lax
from jax.experimental import pallas as pl
from jax.experimental.pallas import tpu as pltpu


_SUBLANE_ALIGN = 32            # dense sublane packing for f32 / bf16 / int8
_VMEM_BLOCK_BUDGET = 40 << 20  # target footprint: streaming blocks + f32 temps
_VMEM_LIMIT_BYTES = 56 << 20   # > scoped defaults; < v7x's 64 MiB physical VMEM


def _ceil_div(a, b):
    return -(-a // b)


def _round_up(a, m):
    return _ceil_div(a, m) * m


def _choose_tile_rows(T, E, in_itemsize, out_itemsize, max_tile_rows=None):
    """Pick the token-tile height for the (T, E) LayerNorm grid."""
    # Per-row VMEM cost: double-buffered input + output blocks plus ~3 f32
    # temporaries (x, xc, y) that Mosaic materializes for large blocks.
    per_row = 2 * E * in_itemsize + 2 * E * out_itemsize + 3 * E * 4
    cap = max(_SUBLANE_ALIGN,
              (_VMEM_BLOCK_BUDGET // per_row) // _SUBLANE_ALIGN * _SUBLANE_ALIGN)
    if max_tile_rows is not None:
        cap = max(_SUBLANE_ALIGN,
                  min(cap, (max_tile_rows // _SUBLANE_ALIGN) * _SUBLANE_ALIGN))
    if T <= _SUBLANE_ALIGN:
        return T                       # single full-extent block (always legal)
    if T <= cap:
        # Whole problem fits in one block: split into two grid steps so both
        # v7x TensorCores get work through the "parallel" grid axis.
        return min(_round_up(_ceil_div(T, 2), _SUBLANE_ALIGN), cap)
    tile = cap
    n_steps = _ceil_div(T, tile)
    if n_steps % 2 == 1:               # prefer an even step count (2 TCs on v7x)
        cand = _round_up(_ceil_div(T, n_steps + 1), _SUBLANE_ALIGN)
        if cand >= _SUBLANE_ALIGN and _ceil_div(T, cand) % 2 == 0:
            tile = cand
    return tile


def layernorm_kernel(x_ref, w_ref, b_ref, o_ref, *, eps):
    # x_ref: (tile_t, E)   w_ref / b_ref: (1, E)   o_ref: (tile_t, E)
    x = x_ref[...].astype(jnp.float32)

    mean = jnp.mean(x, axis=-1, keepdims=True)
    xc = x - mean
    var = jnp.mean(xc * xc, axis=-1, keepdims=True)   # unbiased=False (population var)
    inv = lax.rsqrt(var + eps)                        # EUP rsqrt — separate VLIW slot

    y = xc * inv * w_ref[...].astype(jnp.float32) + b_ref[...].astype(jnp.float32)
    o_ref[...] = y.astype(o_ref.dtype)


@functools.partial(jax.jit, static_argnames=("eps", "max_tile_rows"))
def layernorm_forward(residual, w, b, *, eps=1e-5, max_tile_rows=None):
    *lead, E = residual.shape
    T = 1
    for d in lead:
        T *= d

    x2d = residual.reshape(T, E)
    w2d = w.reshape(1, E)
    b2d = b.reshape(1, E)

    in_itemsize = jnp.dtype(residual.dtype).itemsize
    out_itemsize = in_itemsize
    tile = _choose_tile_rows(T, E, in_itemsize, out_itemsize, max_tile_rows)
    n_steps = _ceil_div(T, tile)       # ragged last block is masked by Pallas

    cost = pl.CostEstimate(
        flops=int(10 * T * E),                      # sub, sq, 2 reduces, scale, affine
        transcendentals=int(T),                     # one rsqrt per row
        bytes_accessed=int(T * E * (in_itemsize + out_itemsize)
                           + 2 * E * in_itemsize),  # stream x in, y out, w/b once
    )

    kernel = functools.partial(layernorm_kernel, eps=float(eps))

    out2d = pl.pallas_call(
        kernel,
        out_shape=jax.ShapeDtypeStruct((T, E), residual.dtype),
        grid_spec=pltpu.PrefetchScalarGridSpec(
            num_scalar_prefetch=0,
            grid=(n_steps,),
            in_specs=[
                pl.BlockSpec((tile, E), lambda i: (i, 0)),   # streamed token tile
                pl.BlockSpec((1, E), lambda i: (0, 0)),      # scale w (resident)
                pl.BlockSpec((1, E), lambda i: (0, 0)),      # bias  b (resident)
            ],
            out_specs=pl.BlockSpec((tile, E), lambda i: (i, 0)),
        ),
        compiler_params=pltpu.CompilerParams(
            dimension_semantics=("parallel",),       # shard token axis on v7x's 2 TCs
            vmem_limit_bytes=_VMEM_LIMIT_BYTES,
        ),
        cost_estimate=cost,
    )(x2d, w2d, b2d)

    return out2d.reshape(residual.shape)


def layernorm_reference(residual, w, b, eps=1e-5):
    x = residual.astype(jnp.float32)
    mean = jnp.mean(x, axis=-1, keepdims=True)
    var = jnp.var(x, axis=-1, keepdims=True)   # ddof=0 == unbiased=False
    y = (x - mean) / jnp.sqrt(var + eps)
    y = y * w.astype(jnp.float32) + b.astype(jnp.float32)
    return y.astype(residual.dtype)


if __name__ == "__main__":
    key = jax.random.PRNGKey(0)

    # --- Case 1: the toy spec shape (cfg.d_model=32), f32, single grid step.
    B, S, E = 2, 8, 32
    k_x, k_w, k_b, key = jax.random.split(key, 4)
    residual = jax.random.normal(k_x, (B, S, E), dtype=jnp.float32)
    # Module initializes w=ones, b=zeros; use non-trivial values to exercise
    # the scale/shift path while keeping identical forward semantics.
    w = 1.0 + 0.1 * jax.random.normal(k_w, (E,), dtype=jnp.float32)
    b = 0.1 * jax.random.normal(k_b, (E,), dtype=jnp.float32)

    out = jax.block_until_ready(layernorm_forward(residual, w, b, eps=1e-5))
    ref = layernorm_reference(residual, w, b, eps=1e-5)
    assert out.shape == (B, S, E)
    assert jnp.allclose(out, ref, atol=1e-5, rtol=1e-5), "f32 mismatch vs reference"

    # --- Case 2: bf16, lane-dense E=128, token count (120) that does NOT
    # divide the forced 32-row tile -> exercises the ragged/masked last block
    # and the bf16 sublane-packing path on a 4-step grid.
    B2, S2, E2 = 3, 40, 128
    k_x, k_w, k_b, key = jax.random.split(key, 4)
    residual2 = jax.random.normal(k_x, (B2, S2, E2), dtype=jnp.float32).astype(jnp.bfloat16)
    w2 = (1.0 + 0.1 * jax.random.normal(k_w, (E2,), dtype=jnp.float32)).astype(jnp.bfloat16)
    b2 = (0.1 * jax.random.normal(k_b, (E2,), dtype=jnp.float32)).astype(jnp.bfloat16)

    out2 = jax.block_until_ready(
        layernorm_forward(residual2, w2, b2, eps=1e-5, max_tile_rows=32))
    ref2 = layernorm_reference(residual2, w2, b2, eps=1e-5)
    assert out2.shape == (B2, S2, E2)
    assert jnp.allclose(out2.astype(jnp.float32), ref2.astype(jnp.float32),
                        atol=3e-2, rtol=3e-2), "bf16 mismatch vs reference"

    print("KERNEL_OK")
</pallas_src>

<mosaic_0001>
module attributes {stable_mosaic.version = 11 : i64} {
  func.func @layernorm_kernel(%arg0: i32, %arg1: memref<16x32xf32, #tpu.memory_space<vmem>>, %arg2: memref<1x32xf32, #tpu.memory_space<vmem>>, %arg3: memref<1x32xf32, #tpu.memory_space<vmem>>, %arg4: memref<16x32xf32, #tpu.memory_space<vmem>>) attributes {dimension_semantics = [#tpu.dimension_semantics<parallel>], iteration_bounds = array<i64: 1>, scalar_prefetch = 0 : i64, scratch_operands = 0 : i64, tpu.core_type = #tpu.core_type<tc>, window_params = [{transform_indices = @transform_0, window_bounds = array<i64: 16, 32>}, {pipeline_mode = #tpu.pipeline_mode<synchronous>, transform_indices = @transform_1, window_bounds = array<i64: 1, 32>}, {pipeline_mode = #tpu.pipeline_mode<synchronous>, transform_indices = @transform_2, window_bounds = array<i64: 1, 32>}, {transform_indices = @transform_3, window_bounds = array<i64: 16, 32>}]} {
    %c0 = arith.constant 0 : index
    %c0_0 = arith.constant 0 : index
    %0 = vector.load %arg1[%c0, %c0_0] : memref<16x32xf32, #tpu.memory_space<vmem>>, vector<16x32xf32>
    %cst = arith.constant dense<0.000000e+00> : vector<16xf32>
    %1 = vector.multi_reduction <add>, %0, %cst [1] : vector<16x32xf32> to vector<16xf32>
    %2 = vector.shape_cast %1 : vector<16xf32> to vector<16x1xf32>
    %cst_1 = arith.constant 3.200000e+01 : f32
    %3 = vector.broadcast %cst_1 : f32 to vector<16x1xf32>
    %4 = arith.divf %2, %3 : vector<16x1xf32>
    %5 = vector.broadcast %4 : vector<16x1xf32> to vector<16x32xf32>
    %6 = arith.subf %0, %5 : vector<16x32xf32>
    %7 = arith.mulf %6, %6 : vector<16x32xf32>
    %cst_2 = arith.constant dense<0.000000e+00> : vector<16xf32>
    %8 = vector.multi_reduction <add>, %7, %cst_2 [1] : vector<16x32xf32> to vector<16xf32>
    %9 = vector.shape_cast %8 : vector<16xf32> to vector<16x1xf32>
    %cst_3 = arith.constant 3.200000e+01 : f32
    %10 = vector.broadcast %cst_3 : f32 to vector<16x1xf32>
    %11 = arith.divf %9, %10 : vector<16x1xf32>
    %cst_4 = arith.constant 9.99999974E-6 : f32
    %12 = vector.broadcast %cst_4 : f32 to vector<16x1xf32>
    %13 = arith.addf %11, %12 : vector<16x1xf32>
    %14 = math.rsqrt %13 : vector<16x1xf32>
    %15 = vector.broadcast %14 : vector<16x1xf32> to vector<16x32xf32>
    %16 = arith.mulf %6, %15 : vector<16x32xf32>
    %c0_5 = arith.constant 0 : index
    %c0_6 = arith.constant 0 : index
    %17 = vector.load %arg2[%c0_5, %c0_6] : memref<1x32xf32, #tpu.memory_space<vmem>>, vector<1x32xf32>
    %18 = vector.broadcast %17 : vector<1x32xf32> to vector<16x32xf32>
    %19 = arith.mulf %16, %18 : vector<16x32xf32>
    %c0_7 = arith.constant 0 : index
    %c0_8 = arith.constant 0 : index
    %20 = vector.load %arg3[%c0_7, %c0_8] : memref<1x32xf32, #tpu.memory_space<vmem>>, vector<1x32xf32>
    %21 = vector.broadcast %20 : vector<1x32xf32> to vector<16x32xf32>
    %22 = arith.addf %19, %21 : vector<16x32xf32>
    %c0_9 = arith.constant 0 : index
    %c0_10 = arith.constant 0 : index
    %23 = vector.load %arg4[%c0_9, %c0_10] : memref<16x32xf32, #tpu.memory_space<vmem>>, vector<16x32xf32>
    tpu.vector_store %arg4[%c0_9, %c0_10], %22 {strides = array<i32>} : memref<16x32xf32, #tpu.memory_space<vmem>>, vector<16x32xf32>,
    return
  }
  func.func @transform_0(%arg0: i32) -> (i32, i32) {
    %c0_i32 = arith.constant 0 : i32
    %c0_i32_0 = arith.constant 0 : i32
    return %arg0, %c0_i32 : i32, i32
  }
  func.func @transform_1(%arg0: i32) -> (i32, i32) {
    %c0_i32 = arith.constant 0 : i32
    %c0_i32_0 = arith.constant 0 : i32
    %c0_i32_1 = arith.constant 0 : i32
    return %c0_i32, %c0_i32_0 : i32, i32
  }
  func.func @transform_2(%arg0: i32) -> (i32, i32) {
    %c0_i32 = arith.constant 0 : i32
    %c0_i32_0 = arith.constant 0 : i32
    %c0_i32_1 = arith.constant 0 : i32
    return %c0_i32, %c0_i32_0 : i32, i32
  }
  func.func @transform_3(%arg0: i32) -> (i32, i32) {
    %c0_i32 = arith.constant 0 : i32
    %c0_i32_0 = arith.constant 0 : i32
    return %arg0, %c0_i32 : i32, i32
  }
}

</mosaic_0001>

<llo_original>
// kernel: layernorm_forward.1
$region0: #{layernorm_forward.1}
  #allocation0 [shape = 'u32[]', space=smem, size = 0x4, offset = 0x4, fixed_abs, tag = 'smem constant byte address 0x4 - core index']
  #allocation1 [shape = 'u32[72,128]{1,0:T(1,128)}', space=vmem, size = 0x9000, scoped, tag = 'internal scratch']
  %s0 = inlined_call_operand.hbm [shape: f32[16,32], index: 0, kind: input, shape index: {}]
  %s1 = inlined_call_operand.vmem [shape: f32[1,32], index: 1, kind: input, shape index: {}]
  %s2 = inlined_call_operand.vmem [shape: f32[1,32], index: 2, kind: input, shape index: {}]
  %s3 = inlined_call_operand.hbm [shape: f32[16,32], index: 3, kind: output, shape index: {}]
  %s4 = sld [smem:[#allocation0]]
  $region26: #{layernorm_forward.1} parent=0
    _
  %s6 = ssub.s32 1, %s4
  %s7 = scalar_select 0, %s6, %s4
  $region1: #{layernorm_forward.1} parent=0
    #allocation2 [shape = 'u8[8192]{0}', space=vmem, size = 0x2000, scoped, tag = 'input window, operand 0, single buffered']
    #allocation3 [shape = 's32[1]{0}', space=sflag, size = 0x4, scoped, tag = 'scoped memory for layernorm_forward.1']
    #allocation4 [shape = 's32[1]{0}', space=sflag, size = 0x4, scoped, tag = 'scoped memory for layernorm_forward.1']
    #allocation5 [shape = 'u8[8192]{0}', space=vmem, size = 0x2000, scoped, tag = 'output window, operand 0, single buffered']
    %8 = vsyncpa [#allocation3], 0
    %9 = vsyncpa [#allocation4], 0
    // Predicated region
    $region2: #{layernorm_forward.1} parent=1 // pred_check
      _
    $region3: #{layernorm_forward.1} parent=1 // pred_check_branch
      %11 = sbr.rel (0) target = $region5
    $region4: #{layernorm_forward.1} parent=1 // pred_region
      %13 = vsyncadd [#allocation3], 0
      %s14 = sshll.u32 %s0, 4
      %s15 = int_to_ptr.hbm [resolvable:$true] %s14
      %s16 = sshll.u32 [#allocation2], 4
      %s17 = int_to_ptr.vmem [resolvable:$true] %s16
      %22 = dma.hbm_to_vmem [thread:$0]  %s15, 256, %s17, [#allocation3], 128, 128, 8
    $region5: #{layernorm_forward.1} parent=1 // pred_fallthru
      _
    // Predicated region
    $region6: #{layernorm_forward.1} parent=1 // pred_check
      _
    $region7: #{layernorm_forward.1} parent=1 // pred_check_branch
      %24 = sbr.rel (0) target = $region9
    $region8: #{layernorm_forward.1} parent=1 // pred_region
      _
    $region9: #{layernorm_forward.1} parent=1 // pred_fallthru
      _
    // Predicated region
    $region10: #{layernorm_forward.1} parent=1 // pred_check
      _
    $region11: #{layernorm_forward.1} parent=1 // pred_check_branch
      %26 = sbr.rel (0) target = $region13
    $region12: #{layernorm_forward.1} parent=1 // pred_region
      _
    $region13: #{layernorm_forward.1} parent=1 // pred_fallthru
      _
    // Predicated region
    $region14: #{layernorm_forward.1} parent=1 // pred_check
      _
    $region15: #{layernorm_forward.1} parent=1 // pred_check_branch
      %28 = sbr.rel (0) target = $region17
    $region16: #{layernorm_forward.1} parent=1 // pred_region
      %30 = dma.done [#allocation3], 256
    $region17: #{layernorm_forward.1} parent=1 // pred_fallthru
      _
    %v31 = vld [vmem:[#allocation2] sm:$0xff]
    %v32 = vld [vmem:[#allocation2 + $0x8] sm:$0xff]
    %vm33 = vcmask 261120
    %v34 = vsel %vm33, %v31, 0.0
    %35 = vadd.xlane.f32.xlu0 %v34
    %v36 = vpop.xlane.xlu0 %35
    %v37 = vsel %vm33, %v32, 0.0
    %38 = vadd.xlane.f32.xlu0 %v37
    %v39 = vpop.xlane.xlu0 %38
    %v40 = vrcp.pop 32.0
    %v41 = vmul.f32 32.0, %v40
    %v42 = vsub.f32 1.0, %v41
    %v43 = vmul.f32 %v40, %v42
    %v44 = vadd.f32 %v40, %v43
    %vm45 = vweird.f32 %v40
    %v46 = vsel %vm45, %v40, %v44
    %v47 = vmul.f32 %v36, %v46
    %v48 = vmul.f32 %v39, %v46
    %v49 = vsub.f32 %v31, %v47
    %v50 = vsub.f32 %v32, %v48
    %v51 = vmul.f32 %v49, %v49
    %v52 = vmul.f32 %v50, %v50
    %v53 = vsel %vm33, %v51, 0.0
    %54 = vadd.xlane.f32.xlu0 %v53
    %v55 = vpop.xlane.xlu0 %54
    %v56 = vsel %vm33, %v52, 0.0
    %57 = vadd.xlane.f32.xlu0 %v56
    %v58 = vpop.xlane.xlu0 %57
    %v59 = vmul.f32 %v55, %v46
    %v60 = vmul.f32 %v58, %v46
    %v61 = vadd.f32 %v59, 1e-05
    %v62 = vadd.f32 %v60, 1e-05
    %v63 = vrsqrt.pop %v61
    %v64 = vmul.f32 %v63, %v61
    %v65 = vmul.f32 %v64, %v63
    %v66 = vmul.f32 0.5, %v65
    %v67 = vsub.f32 1.5, %v66
    %v68 = vmul.f32 %v63, %v67
    %vm69 = vweird.f32 %v61
    %vm70 = vweird.f32 %v63
    %vm71 = vmor %vm69, %vm70
    %v72 = vsel %vm71, %v63, %v68
    %v73 = vrsqrt.pop %v62
    %v74 = vmul.f32 %v73, %v62
    %v75 = vmul.f32 %v74, %v73
    %v76 = vmul.f32 0.5, %v75
    %v77 = vsub.f32 1.5, %v76
    %v78 = vmul.f32 %v73, %v77
    %vm79 = vweird.f32 %v62
    %vm80 = vweird.f32 %v73
    %vm81 = vmor %vm79, %vm80
    %v82 = vsel %vm81, %v73, %v78
    %v83 = vmul.f32 %v49, %v72
    %v84 = vmul.f32 %v50, %v82
    %v85 = vld [vmem:[%s1] sm:$0x1]
    %v87 = vperm.slane %v85, 0
    %v89 = vmul.f32 %v83, %v87
    %v90 = vmul.f32 %v84, %v87
    %v91 = vld [vmem:[%s2] sm:$0x1]
    %v93 = vperm.slane %v91, 0
    %v95 = vadd.f32 %v89, %v93
    %v96 = vadd.f32 %v90, %v93
    %97 = vst.msk [vmem:[#allocation5] sm:$0xff] %vm33, %v95
    %98 = vst.msk [vmem:[#allocation5 + $0x8] sm:$0xff] %vm33, %v96
    // Predicated region
    $region18: #{layernorm_forward.1} parent=1 // pred_check
      _
    $region19: #{layernorm_forward.1} parent=1 // pred_check_branch
      %100 = sbr.rel (0) target = $region21
    $region20: #{layernorm_forward.1} parent=1 // pred_region
      %102 = vsyncadd [#allocation4], 0
      %s103 = sshll.u32 [#allocation5], 4
      %s104 = int_to_ptr.vmem [resolvable:$true] %s103
      %s105 = sshll.u32 %s3, 4
      %s106 = int_to_ptr.hbm [resolvable:$true] %s105
      %111 = dma.vmem_to_hbm [thread:$0]  %s104, 256, %s106, [#allocation4], 128, 128, 8
    $region21: #{layernorm_forward.1} parent=1 // pred_fallthru
      _
    // Predicated region
    $region22: #{layernorm_forward.1} parent=1 // pred_check
      _
    $region23: #{layernorm_forward.1} parent=1 // pred_check_branch
      %113 = sbr.rel (0) target = $region25
    $region24: #{layernorm_forward.1} parent=1 // pred_region
      %115 = dma.done [#allocation4], 256
    $region25: #{layernorm_forward.1} parent=1 // pred_fallthru
      _
    %116 = vsyncpa [#allocation3], 1
    %117 = vsyncpa [#allocation4], 1

</llo_original>
